<compile_context>
chip_gen: v6e
topology: v6e:2x2x1
jax: 0.10.0
libtpu: 0.0.40
codegen_flags: <defaults>
</compile_context>

<pallas_src>
import functools

import jax
import jax.numpy as jnp
from jax.experimental import pallas as pl
from jax.experimental.pallas import tpu as pltpu

LANE = 128


def _round_up(v, m):
    return ((v + m - 1) // m) * m


def _detect_num_tensorcores():
    """Best-effort TensorCore count (v7x: 2/chip, v5e/v6e: 1). Defaults to 1."""
    try:
        info = pltpu.get_tpu_info()
        for name in ("num_cores", "core_count", "num_tensorcores",
                     "tensorcores_per_chip"):
            v = getattr(info, name, None)
            if isinstance(v, int) and v > 0:
                return v
    except Exception:
        pass
    return 1


# ----------------------------- Pallas kernel ------------------------------ #

def _generator_kernel(
    kappa_upscale, kappa_add, H, dim_z,     # compile-time Python constants
    x_ref,                                  # (TM, dim_x)   natural layout
    w1_ref, b1_ref,                         # (2H, dim_x), (2H, 1)  fused layer-1
    w2m_ref, b2m_ref,                       # (H, H),      (H, 1)
    wh_ref, bh_ref,                         # (dim_z+1, 2H), (dim_z+1, 1) merged head
    out_ref,                                # (dim_z+1, TM)  rows [0:dim_z]=mu, row dim_z=kappa
):
    # ---- fused first layer for both nets ----
    # Contract x's feature (lane) axis directly: (2H, dim_x) x (TM, dim_x)^T
    # -> (2H, TM).  Transposed-RHS contraction; batch lands on lanes.
    h1 = jax.lax.dot_general(
        w1_ref[...], x_ref[...],
        dimension_numbers=(((1,), (1,)), ((), ())),
        preferred_element_type=jnp.float32) + b1_ref[...]
    h1 = jnp.maximum(h1, 0.0)               # (2H, TM)
    h_mu = h1[:H, :]                        # (H, TM)   (H % 8 == 0 -> free slice)
    h_k = h1[H:, :]                         # (H, TM)

    # ---- mu_net second layer ----
    h2 = jnp.dot(w2m_ref[...], h_mu, preferred_element_type=jnp.float32) + b2m_ref[...]
    h2 = jnp.maximum(h2, 0.0)               # (H, TM)

    # ---- merged head: [w3m | 0 ; 0 | w2k] @ [h2 ; h_k] ----
    cat = jnp.concatenate([h2, h_k], axis=0)                       # (2H, TM)
    head = jnp.dot(wh_ref[...], cat,
                   preferred_element_type=jnp.float32) + bh_ref[...]  # (dim_z+1, TM)

    # mu = mu / ||mu|| over dim_z (sublane axis); eps keeps pad columns NaN-free
    mu = head[:dim_z, :]
    inv_norm = jax.lax.rsqrt(jnp.sum(mu * mu, axis=0, keepdims=True) + 1e-30)
    out_ref[:dim_z, :] = mu * inv_norm

    # kappa = exp(upscale * softplus(k_raw) + add), numerically-safe softplus
    k_raw = head[dim_z:, :]                 # (1, TM) lane-dense
    sp = jnp.maximum(k_raw, 0.0) + jnp.log1p(jnp.exp(-jnp.abs(k_raw)))
    out_ref[dim_z:, :] = jnp.exp(kappa_upscale * sp + kappa_add)


# ------------------------------ host wrapper ------------------------------ #

def generator_forward(x, params, kappa_upscale, kappa_add, *,
                      tm=8192, num_tensorcores=None):
    """x: (N, dim_x) float32.  Returns (mu (N, dim_z), kappa (N, 1))."""
    N, dim_x = x.shape
    H = params["w1m"].shape[1]
    dim_z = params["w3m"].shape[1]
    assert H % 8 == 0, "dim_hidden must be a multiple of 8 (sublane) for free slicing"

    cores = num_tensorcores if num_tensorcores is not None else _detect_num_tensorcores()
    tm_target = max(LANE, (int(tm) // LANE) * LANE)

    # ---- batch tile / grid selection (no host-side copy of x) ----
    if N <= tm_target:
        if cores >= 2 and N >= 2 * LANE:
            # give both TensorCores one (still large) block each
            blk = _round_up(-(-N // 2), LANE)
            grid = pl.cdiv(N, blk)
        else:
            blk, grid = N, 1          # single full block, no alignment constraints
    else:
        blk = tm_target
        grid = pl.cdiv(N, blk)
        if cores >= 2 and grid % 2 == 1:
            # even number of large blocks so megacore sharding uses both cores
            blk = max(LANE, _round_up(-(-N // (grid + 1)), LANE))
            grid = pl.cdiv(N, blk)
    n_pad = grid * blk                # output is allocated padded; sliced below

    # ---- weight prep (once, on host): transpose / fuse / block-diag head ----
    f32 = jnp.float32
    w1_t = jnp.concatenate([params["w1m"], params["w1k"]], axis=1).T.astype(f32)  # (2H, dim_x)
    b1_t = jnp.concatenate([params["b1m"], params["b1k"]], axis=1).T.astype(f32)  # (2H, 1)
    w2m_t = params["w2m"].T.astype(f32)                                           # (H, H)
    b2m_t = params["b2m"].T.astype(f32)                                           # (H, 1)
    w3m_t = params["w3m"].T.astype(f32)                                           # (dim_z, H)
    w2k_t = params["w2k"].T.astype(f32)                                           # (1, H)
    wh = jnp.concatenate(
        [jnp.concatenate([w3m_t, jnp.zeros((dim_z, H), f32)], axis=1),
         jnp.concatenate([jnp.zeros((1, H), f32), w2k_t], axis=1)],
        axis=0)                                                                    # (dim_z+1, 2H)
    bh = jnp.concatenate([params["b3m"].T, params["b2k"].T], axis=0).astype(f32)   # (dim_z+1, 1)

    full = lambda a: pl.BlockSpec(a.shape, lambda i: (0, 0))

    grid_spec = pltpu.PrefetchScalarGridSpec(
        num_scalar_prefetch=0,
        grid=(grid,),
        in_specs=[
            # natural-layout x tile; last block is masked if blk does not divide N
            # (if profiling shows exposed DMA, add pipeline_mode=pl.Buffered(3) here)
            pl.BlockSpec((blk, dim_x), lambda i: (i, 0)),
            full(w1_t), full(b1_t),
            full(w2m_t), full(b2m_t),
            full(wh), full(bh),
        ],
        out_specs=pl.BlockSpec((dim_z + 1, blk), lambda i: (0, i)),   # lane-dense
    )

    kernel = functools.partial(
        _generator_kernel, float(kappa_upscale), float(kappa_add), int(H), int(dim_z))

    out_t = pl.pallas_call(
        kernel,
        out_shape=jax.ShapeDtypeStruct((dim_z + 1, n_pad), jnp.float32),
        grid_spec=grid_spec,
        compiler_params=pltpu.CompilerParams(
            dimension_semantics=("parallel",),
            vmem_limit_bytes=48 * 1024 * 1024,
        ),
    )(x.astype(f32), w1_t, b1_t, w2m_t, b2m_t, wh, bh)

    mu = out_t[:dim_z, :N].T              # (N, dim_z)
    kappa = out_t[dim_z:, :N].T           # (N, 1)
    return mu, kappa


# --------------------------- parameter construction ------------------------ #

def _linear_init(key, fan_in, fan_out):
    """Mimics torch.nn.Linear default init (uniform +/- 1/sqrt(fan_in))."""
    kw, kb = jax.random.split(key)
    bound = 1.0 / jnp.sqrt(float(fan_in))
    w = jax.random.uniform(kw, (fan_in, fan_out), jnp.float32, -bound, bound)
    b = jax.random.uniform(kb, (1, fan_out), jnp.float32, -bound, bound)
    return w, b


def make_generator_params(key, dim_x=10, dim_z=2, dim_hidden=32):
    keys = jax.random.split(key, 5)
    w1m, b1m = _linear_init(keys[0], dim_x, dim_hidden)
    w2m, b2m = _linear_init(keys[1], dim_hidden, dim_hidden)
    w3m, b3m = _linear_init(keys[2], dim_hidden, dim_z)
    w1k, b1k = _linear_init(keys[3], dim_x, dim_hidden)
    w2k, b2k = _linear_init(keys[4], dim_hidden, 1)
    return dict(w1m=w1m, b1m=b1m, w2m=w2m, b2m=b2m, w3m=w3m, b3m=b3m,
                w1k=w1k, b1k=b1k, w2k=w2k, b2k=b2k)


def rescale_kappa(key, params, post_kappa_min=20.0, post_kappa_max=80.0):
    """Plain-JAX reproduction of Generator._rescale_kappa (init-time glue)."""
    dim_x = params["w1k"].shape[0]
    x_s = jax.random.uniform(key, (1000, dim_x), jnp.float32)  # torch.rand
    hk = jnp.maximum(x_s @ params["w1k"] + params["b1k"], 0.0)
    k_raw = hk @ params["w2k"] + params["b2k"]
    kappa_samples = jnp.log(1.0 + jnp.exp(k_raw))
    s_min, s_max = jnp.min(kappa_samples), jnp.max(kappa_samples)
    upscale = (jnp.log(post_kappa_max) - jnp.log(post_kappa_min)) / (s_max - s_min)
    add = jnp.log(post_kappa_max) - upscale * s_max
    return float(upscale), float(add)


# ------------------------------ pure-JAX reference ------------------------- #

def generator_forward_ref(x, p, up, add):
    h = jnp.maximum(x @ p["w1m"] + p["b1m"], 0.0)
    h = jnp.maximum(h @ p["w2m"] + p["b2m"], 0.0)
    mu = h @ p["w3m"] + p["b3m"]
    mu = mu / jnp.linalg.norm(mu, axis=-1, keepdims=True)
    hk = jnp.maximum(x @ p["w1k"] + p["b1k"], 0.0)
    k_raw = hk @ p["w2k"] + p["b2k"]
    kappa = jnp.exp(up * jnp.log(1.0 + jnp.exp(k_raw)) + add)
    return mu, kappa


# ----------------------------------- main ---------------------------------- #

if __name__ == "__main__":
    key = jax.random.PRNGKey(0)
    k_params, k_rescale, k_x1, k_x2 = jax.random.split(key, 4)

    dim_x, dim_z, dim_hidden = 10, 2, 32

    params = make_generator_params(k_params, dim_x=dim_x, dim_z=dim_z,
                                   dim_hidden=dim_hidden)
    kappa_upscale, kappa_add = rescale_kappa(k_rescale, params)

    # small batch (single full block, no padding anywhere)
    x_small = jax.random.uniform(k_x1, (16, dim_x), jnp.float32)   # matches _sample_x
    mu, kappa = generator_forward(x_small, params, kappa_upscale, kappa_add)
    jax.block_until_ready((mu, kappa))
    mu_ref, kappa_ref = generator_forward_ref(x_small, params, kappa_upscale, kappa_add)
    assert mu.shape == (16, dim_z) and kappa.shape == (16, 1)
    assert jnp.allclose(mu, mu_ref, atol=1e-4, rtol=1e-4)
    assert jnp.allclose(kappa, kappa_ref, atol=1e-3, rtol=1e-3)

    # medium batch, default tiling (still a single large block)
    x_big = jax.random.uniform(k_x2, (200, dim_x), jnp.float32)
    mu2, kappa2 = generator_forward(x_big, params, kappa_upscale, kappa_add)
    jax.block_until_ready((mu2, kappa2))
    mu2_ref, kappa2_ref = generator_forward_ref(x_big, params, kappa_upscale, kappa_add)
    assert mu2.shape == (200, dim_z) and kappa2.shape == (200, 1)
    assert jnp.allclose(mu2, mu2_ref, atol=1e-4, rtol=1e-4)
    assert jnp.allclose(kappa2, kappa2_ref, atol=1e-3, rtol=1e-3)

    # same batch through the multi-block path (grid=2, masked tail block)
    mu3, kappa3 = generator_forward(x_big, params, kappa_upscale, kappa_add,
                                    tm=128, num_tensorcores=1)
    jax.block_until_ready((mu3, kappa3))
    assert mu3.shape == (200, dim_z) and kappa3.shape == (200, 1)
    assert jnp.allclose(mu3, mu2_ref, atol=1e-4, rtol=1e-4)
    assert jnp.allclose(kappa3, kappa2_ref, atol=1e-3, rtol=1e-3)

    print("KERNEL_OK")
</pallas_src>

<mosaic_0001>
module attributes {stable_mosaic.version = 11 : i64} {
  func.func @_generator_kernel(%arg0: i32, %arg1: memref<16x10xf32, #tpu.memory_space<vmem>>, %arg2: memref<64x10xf32, #tpu.memory_space<vmem>>, %arg3: memref<64x1xf32, #tpu.memory_space<vmem>>, %arg4: memref<32x32xf32, #tpu.memory_space<vmem>>, %arg5: memref<32x1xf32, #tpu.memory_space<vmem>>, %arg6: memref<3x64xf32, #tpu.memory_space<vmem>>, %arg7: memref<3x1xf32, #tpu.memory_space<vmem>>, %arg8: memref<3x16xf32, #tpu.memory_space<vmem>>) attributes {dimension_semantics = [#tpu.dimension_semantics<parallel>], iteration_bounds = array<i64: 1>, scalar_prefetch = 0 : i64, scratch_operands = 0 : i64, tpu.core_type = #tpu.core_type<tc>, window_params = [{transform_indices = @transform_0, window_bounds = array<i64: 16, 10>}, {pipeline_mode = #tpu.pipeline_mode<synchronous>, transform_indices = @transform_1, window_bounds = array<i64: 64, 10>}, {pipeline_mode = #tpu.pipeline_mode<synchronous>, transform_indices = @transform_2, window_bounds = array<i64: 64, 1>}, {pipeline_mode = #tpu.pipeline_mode<synchronous>, transform_indices = @transform_3, window_bounds = array<i64: 32, 32>}, {pipeline_mode = #tpu.pipeline_mode<synchronous>, transform_indices = @transform_4, window_bounds = array<i64: 32, 1>}, {pipeline_mode = #tpu.pipeline_mode<synchronous>, transform_indices = @transform_5, window_bounds = array<i64: 3, 64>}, {pipeline_mode = #tpu.pipeline_mode<synchronous>, transform_indices = @transform_6, window_bounds = array<i64: 3, 1>}, {transform_indices = @transform_7, window_bounds = array<i64: 3, 16>}]} {
    %c0 = arith.constant 0 : index
    %c0_0 = arith.constant 0 : index
    %0 = vector.load %arg2[%c0, %c0_0] : memref<64x10xf32, #tpu.memory_space<vmem>>, vector<64x10xf32>
    %c0_1 = arith.constant 0 : index
    %c0_2 = arith.constant 0 : index
    %1 = vector.load %arg1[%c0_1, %c0_2] : memref<16x10xf32, #tpu.memory_space<vmem>>, vector<16x10xf32>
    %cst = arith.constant dense<0.000000e+00> : vector<64x16xf32>
    %2 = tpu.matmul %0, %1, %cst {dimension_numbers = #tpu.dot_dimension_numbers<[1], [1], [0], [0], [0, 0, 1, 0], [], []>} : vector<64x10xf32>, vector<16x10xf32>, vector<64x16xf32> -> vector<64x16xf32>
    %c0_3 = arith.constant 0 : index
    %c0_4 = arith.constant 0 : index
    %3 = vector.load %arg3[%c0_3, %c0_4] : memref<64x1xf32, #tpu.memory_space<vmem>>, vector<64x1xf32>
    %4 = vector.broadcast %3 : vector<64x1xf32> to vector<64x16xf32>
    %5 = arith.addf %2, %4 : vector<64x16xf32>
    %cst_5 = arith.constant 0.000000e+00 : f32
    %6 = vector.broadcast %cst_5 : f32 to vector<64x16xf32>
    %7 = arith.maximumf %5, %6 : vector<64x16xf32>
    %8 = vector.extract_strided_slice %7 {offsets = [0, 0], sizes = [32, 16], strides = [1, 1]} : vector<64x16xf32> to vector<32x16xf32>
    %9 = vector.extract_strided_slice %7 {offsets = [32, 0], sizes = [32, 16], strides = [1, 1]} : vector<64x16xf32> to vector<32x16xf32>
    %c0_6 = arith.constant 0 : index
    %c0_7 = arith.constant 0 : index
    %10 = vector.load %arg4[%c0_6, %c0_7] : memref<32x32xf32, #tpu.memory_space<vmem>>, vector<32x32xf32>
    %cst_8 = arith.constant dense<0.000000e+00> : vector<32x16xf32>
    %11 = tpu.matmul %10, %8, %cst_8 {dimension_numbers = #tpu.dot_dimension_numbers<[1], [0], [0], [1], [0, 0, 1, 1], [], []>} : vector<32x32xf32>, vector<32x16xf32>, vector<32x16xf32> -> vector<32x16xf32>
    %c0_9 = arith.constant 0 : index
    %c0_10 = arith.constant 0 : index
    %12 = vector.load %arg5[%c0_9, %c0_10] : memref<32x1xf32, #tpu.memory_space<vmem>>, vector<32x1xf32>
    %13 = vector.broadcast %12 : vector<32x1xf32> to vector<32x16xf32>
    %14 = arith.addf %11, %13 : vector<32x16xf32>
    %cst_11 = arith.constant 0.000000e+00 : f32
    %15 = vector.broadcast %cst_11 : f32 to vector<32x16xf32>
    %16 = arith.maximumf %14, %15 : vector<32x16xf32>
    %17 = tpu.concatenate %16, %9 in 0 : vector<32x16xf32>, vector<32x16xf32> -> vector<64x16xf32>
    %c0_12 = arith.constant 0 : index
    %c0_13 = arith.constant 0 : index
    %18 = vector.load %arg6[%c0_12, %c0_13] : memref<3x64xf32, #tpu.memory_space<vmem>>, vector<3x64xf32>
    %cst_14 = arith.constant dense<0.000000e+00> : vector<3x16xf32>
    %19 = tpu.matmul %18, %17, %cst_14 {dimension_numbers = #tpu.dot_dimension_numbers<[1], [0], [0], [1], [0, 0, 1, 1], [], []>} : vector<3x64xf32>, vector<64x16xf32>, vector<3x16xf32> -> vector<3x16xf32>
    %c0_15 = arith.constant 0 : index
    %c0_16 = arith.constant 0 : index
    %20 = vector.load %arg7[%c0_15, %c0_16] : memref<3x1xf32, #tpu.memory_space<vmem>>, vector<3x1xf32>
    %21 = vector.broadcast %20 : vector<3x1xf32> to vector<3x16xf32>
    %22 = arith.addf %19, %21 : vector<3x16xf32>
    %23 = vector.extract_strided_slice %22 {offsets = [0, 0], sizes = [2, 16], strides = [1, 1]} : vector<3x16xf32> to vector<2x16xf32>
    %24 = arith.mulf %23, %23 : vector<2x16xf32>
    %cst_17 = arith.constant dense<0.000000e+00> : vector<16xf32>
    %25 = vector.multi_reduction <add>, %24, %cst_17 [0] : vector<2x16xf32> to vector<16xf32>
    %26 = vector.shape_cast %25 : vector<16xf32> to vector<1x16xf32>
    %cst_18 = arith.constant 1.000000e-30 : f32
    %27 = vector.broadcast %cst_18 : f32 to vector<1x16xf32>
    %28 = arith.addf %26, %27 : vector<1x16xf32>
    %29 = math.rsqrt %28 : vector<1x16xf32>
    %30 = vector.broadcast %29 : vector<1x16xf32> to vector<2x16xf32>
    %31 = arith.mulf %23, %30 : vector<2x16xf32>
    %c0_19 = arith.constant 0 : index
    %c0_20 = arith.constant 0 : index
    %32 = vector.load %arg8[%c0_19, %c0_20] : memref<3x16xf32, #tpu.memory_space<vmem>>, vector<2x16xf32>
    tpu.vector_store %arg8[%c0_19, %c0_20], %31 {strides = array<i32>} : memref<3x16xf32, #tpu.memory_space<vmem>>, vector<2x16xf32>,
    %33 = vector.extract_strided_slice %22 {offsets = [2, 0], sizes = [1, 16], strides = [1, 1]} : vector<3x16xf32> to vector<1x16xf32>
    %cst_21 = arith.constant 0.000000e+00 : f32
    %34 = vector.broadcast %cst_21 : f32 to vector<1x16xf32>
    %35 = arith.maximumf %33, %34 : vector<1x16xf32>
    %36 = math.absf %33 : vector<1x16xf32>
    %cst_22 = arith.constant 0.000000e+00 : f32
    %37 = vector.broadcast %cst_22 : f32 to vector<1x16xf32>
    %38 = arith.subf %37, %36 : vector<1x16xf32>
    %39 = math.exp %38 : vector<1x16xf32>
    %40 = math.log1p %39 : vector<1x16xf32>
    %41 = arith.addf %35, %40 : vector<1x16xf32>
    %cst_23 = arith.constant 11.4075508 : f32
    %42 = vector.broadcast %cst_23 : f32 to vector<1x16xf32>
    %43 = arith.mulf %42, %41 : vector<1x16xf32>
    %cst_24 = arith.constant -4.93289375 : f32
    %44 = vector.broadcast %cst_24 : f32 to vector<1x16xf32>
    %45 = arith.addf %43, %44 : vector<1x16xf32>
    %46 = math.exp %45 : vector<1x16xf32>
    %c2 = arith.constant 2 : index
    %c0_25 = arith.constant 0 : index
    %47 = vector.load %arg8[%c2, %c0_25] : memref<3x16xf32, #tpu.memory_space<vmem>>, vector<1x16xf32>
    tpu.vector_store %arg8[%c2, %c0_25], %46 {strides = array<i32>} : memref<3x16xf32, #tpu.memory_space<vmem>>, vector<1x16xf32>,
    return
  }
  func.func @transform_0(%arg0: i32) -> (i32, i32) {
    %c0_i32 = arith.constant 0 : i32
    %c0_i32_0 = arith.constant 0 : i32
    return %arg0, %c0_i32 : i32, i32
  }
  func.func @transform_1(%arg0: i32) -> (i32, i32) {
    %c0_i32 = arith.constant 0 : i32
    %c0_i32_0 = arith.constant 0 : i32
    %c0_i32_1 = arith.constant 0 : i32
    return %c0_i32, %c0_i32_0 : i32, i32
  }
  func.func @transform_2(%arg0: i32) -> (i32, i32) {
    %c0_i32 = arith.constant 0 : i32
    %c0_i32_0 = arith.constant 0 : i32
    %c0_i32_1 = arith.constant 0 : i32
    return %c0_i32, %c0_i32_0 : i32, i32
  }
  func.func @transform_3(%arg0: i32) -> (i32, i32) {
    %c0_i32 = arith.constant 0 : i32
    %c0_i32_0 = arith.constant 0 : i32
    %c0_i32_1 = arith.constant 0 : i32
    return %c0_i32, %c0_i32_0 : i32, i32
  }
  func.func @transform_4(%arg0: i32) -> (i32, i32) {
    %c0_i32 = arith.constant 0 : i32
    %c0_i32_0 = arith.constant 0 : i32
    %c0_i32_1 = arith.constant 0 : i32
    return %c0_i32, %c0_i32_0 : i32, i32
  }
  func.func @transform_5(%arg0: i32) -> (i32, i32) {
    %c0_i32 = arith.constant 0 : i32
    %c0_i32_0 = arith.constant 0 : i32
    %c0_i32_1 = arith.constant 0 : i32
    return %c0_i32, %c0_i32_0 : i32, i32
  }
  func.func @transform_6(%arg0: i32) -> (i32, i32) {
    %c0_i32 = arith.constant 0 : i32
    %c0_i32_0 = arith.constant 0 : i32
    %c0_i32_1 = arith.constant 0 : i32
    return %c0_i32, %c0_i32_0 : i32, i32
  }
  func.func @transform_7(%arg0: i32) -> (i32, i32) {
    %c0_i32 = arith.constant 0 : i32
    %c0_i32_0 = arith.constant 0 : i32
    return %c0_i32, %arg0 : i32, i32
  }
}

</mosaic_0001>

<llo_original>
// kernel: tpu_custom_call.1
$region0: #{tpu_custom_call.1}
  #allocation0 [shape = 'u32[]', space=smem, size = 0x4, offset = 0x4, fixed_abs, tag = 'smem constant byte address 0x4 - core index']
  #allocation1 [shape = 'u32[144,128]{1,0:T(1,128)}', space=vmem, size = 0x12000, scoped, tag = 'internal scratch']
  %s0 = inlined_call_operand.vmem [shape: f32[16,10], index: 0, kind: input, shape index: {}]
  %s1 = inlined_call_operand.vmem [shape: f32[64,10], index: 1, kind: input, shape index: {}]
  %s2 = inlined_call_operand.vmem [shape: f32[64,1], index: 2, kind: input, shape index: {}]
  %s3 = inlined_call_operand.vmem [shape: f32[32,32], index: 3, kind: input, shape index: {}]
  %s4 = inlined_call_operand.vmem [shape: f32[32,1], index: 4, kind: input, shape index: {}]
  %s5 = inlined_call_operand.vmem [shape: f32[3,64], index: 5, kind: input, shape index: {}]
  %s6 = inlined_call_operand.vmem [shape: f32[3,1], index: 6, kind: input, shape index: {}]
  %s7 = inlined_call_operand.hbm [shape: f32[3,16], index: 7, kind: output, shape index: {}]
  %s8 = sld [smem:[#allocation0]]
  $region38: #{tpu_custom_call.1} parent=0
    _
  %s10 = ssub.s32 1, %s8
  %s11 = scalar_select 0, %s10, %s8
  $region1: #{tpu_custom_call.1} parent=0
    #allocation2 [shape = 'u8[2048]{0}', space=vmem, size = 0x800, scoped, tag = 'output window, operand 0, single buffered']
    #allocation3 [shape = 's32[1]{0}', space=sflag, size = 0x4, scoped, tag = 'scoped memory for tpu_custom_call.1']
    %12 = vsyncpa [#allocation3], 0
    // Predicated region
    $region2: #{tpu_custom_call.1} parent=1 // pred_check
      _
    $region3: #{tpu_custom_call.1} parent=1 // pred_check_branch
      %14 = sbr.rel (0) target = $region5
    $region4: #{tpu_custom_call.1} parent=1 // pred_region
      _
    $region5: #{tpu_custom_call.1} parent=1 // pred_fallthru
      _
    // Predicated region
    $region6: #{tpu_custom_call.1} parent=1 // pred_check
      _
    $region7: #{tpu_custom_call.1} parent=1 // pred_check_branch
      %16 = sbr.rel (0) target = $region9
    $region8: #{tpu_custom_call.1} parent=1 // pred_region
      _
    $region9: #{tpu_custom_call.1} parent=1 // pred_fallthru
      _
    // Predicated region
    $region10: #{tpu_custom_call.1} parent=1 // pred_check
      _
    $region11: #{tpu_custom_call.1} parent=1 // pred_check_branch
      %18 = sbr.rel (0) target = $region13
    $region12: #{tpu_custom_call.1} parent=1 // pred_region
      _
    $region13: #{tpu_custom_call.1} parent=1 // pred_fallthru
      _
    // Predicated region
    $region14: #{tpu_custom_call.1} parent=1 // pred_check
      _
    $region15: #{tpu_custom_call.1} parent=1 // pred_check_branch
      %20 = sbr.rel (0) target = $region17
    $region16: #{tpu_custom_call.1} parent=1 // pred_region
      _
    $region17: #{tpu_custom_call.1} parent=1 // pred_fallthru
      _
    // Predicated region
    $region18: #{tpu_custom_call.1} parent=1 // pred_check
      _
    $region19: #{tpu_custom_call.1} parent=1 // pred_check_branch
      %22 = sbr.rel (0) target = $region21
    $region20: #{tpu_custom_call.1} parent=1 // pred_region
      _
    $region21: #{tpu_custom_call.1} parent=1 // pred_fallthru
      _
    // Predicated region
    $region22: #{tpu_custom_call.1} parent=1 // pred_check
      _
    $region23: #{tpu_custom_call.1} parent=1 // pred_check_branch
      %24 = sbr.rel (0) target = $region25
    $region24: #{tpu_custom_call.1} parent=1 // pred_region
      _
    $region25: #{tpu_custom_call.1} parent=1 // pred_fallthru
      _
    // Predicated region
    $region26: #{tpu_custom_call.1} parent=1 // pred_check
      _
    $region27: #{tpu_custom_call.1} parent=1 // pred_check_branch
      %26 = sbr.rel (0) target = $region29
    $region28: #{tpu_custom_call.1} parent=1 // pred_region
      _
    $region29: #{tpu_custom_call.1} parent=1 // pred_fallthru
      _
    %v27 = vld [vmem:[%s1] sm:$0xff]
    %v28 = vld [vmem:[%s1 + $0x8] sm:$0xff]
    %v29 = vld [vmem:[%s1 + $0x10] sm:$0xff]
    %v30 = vld [vmem:[%s1 + $0x18] sm:$0xff]
    %v31 = vld [vmem:[%s1 + $0x20] sm:$0xff]
    %v32 = vld [vmem:[%s1 + $0x28] sm:$0xff]
    %v33 = vld [vmem:[%s1 + $0x30] sm:$0xff]
    %v34 = vld [vmem:[%s1 + $0x38] sm:$0xff]
    %v35 = vld [vmem:[%s0] sm:$0xff]
    %v36 = vld [vmem:[%s0 + $0x8] sm:$0xff]
    %v37 = vld [vmem:[%s2] sm:$0xff]
    %v38 = vld [vmem:[%s2 + $0x8] sm:$0xff]
    %v39 = vld [vmem:[%s2 + $0x10] sm:$0xff]
    %v40 = vld [vmem:[%s2 + $0x18] sm:$0xff]
    %v41 = vld [vmem:[%s2 + $0x20] sm:$0xff]
    %v42 = vld [vmem:[%s2 + $0x28] sm:$0xff]
    %v43 = vld [vmem:[%s2 + $0x30] sm:$0xff]
    %v44 = vld [vmem:[%s2 + $0x38] sm:$0xff]
    %46 = vset.pattern.permute.xlu0 0
    %47 = vperm.xlu0 %46, %v37
    %v48 = vpop.permute.xlu0 %47
    %51 = vset.pattern.permute.xlu0 0
    %52 = vperm.xlu0 %51, %v38
    %v53 = vpop.permute.xlu0 %52
    %56 = vset.pattern.permute.xlu0 0
    %57 = vperm.xlu0 %56, %v39
    %v58 = vpop.permute.xlu0 %57
    %61 = vset.pattern.permute.xlu0 0
    %62 = vperm.xlu0 %61, %v40
    %v63 = vpop.permute.xlu0 %62
    %66 = vset.pattern.permute.xlu0 0
    %67 = vperm.xlu0 %66, %v41
    %v68 = vpop.permute.xlu0 %67
    %71 = vset.pattern.permute.xlu0 0
    %72 = vperm.xlu0 %71, %v42
    %v73 = vpop.permute.xlu0 %72
    %76 = vset.pattern.permute.xlu0 0
    %77 = vperm.xlu0 %76, %v43
    %v78 = vpop.permute.xlu0 %77
    %81 = vset.pattern.permute.xlu0 0
    %82 = vperm.xlu0 %81, %v44
    %v83 = vpop.permute.xlu0 %82
    %vm85 = vcmask 80896
    %v87 = vsel %vm85, %v27, 0
    %v90 = vsel %vm85, %v28, 0
    %v93 = vsel %vm85, %v29, 0
    %v96 = vsel %vm85, %v30, 0
    %v99 = vsel %vm85, %v31, 0
    %v102 = vsel %vm85, %v32, 0
    %v105 = vsel %vm85, %v33, 0
    %v108 = vsel %vm85, %v34, 0
    %v111 = vsel %vm85, %v35, 0
    %v114 = vsel %vm85, %v36, 0
    %116 = vmatprep.subr.mxu0 0.0
    %117 = vmatpush1.xpose.msra.mxu0 0.0
    %118 = vmatprep.subr.mxu0 0.0
    %119 = vmatpush1.xpose.msra.mxu0 0.0
    %120 = vmatprep.subr.mxu0 0.0
    %121 = vmatpush1.xpose.msra.mxu0 0.0
    %122 = vmatprep.subr.mxu0 0.0
    %123 = vmatpush1.xpose.msra.mxu0 0.0
    %124 = vmatprep.subr.mxu0 0.0
    %125 = vmatpush1.xpose.msra.mxu0 0.0
    %126 = vmatprep.subr.mxu0 0.0
    %127 = vmatpush1.xpose.msra.mxu0 0.0
    %128 = vmatprep.subr.mxu0 0.0
    %129 = vmatpush1.xpose.msra.mxu0 0.0
    %130 = vmatprep.subr.mxu0 0.0
    %131 = vmatpush1.xpose.msra.mxu0 0.0
    %132 = vmatprep.subr.mxu0 0.0
    %133 = vmatpush1.xpose.msra.mxu0 0.0
    %134 = vmatprep.subr.mxu0 0.0
    %135 = vmatpush1.xpose.msra.mxu0 0.0
    %136 = vmatprep.subr.mxu0 0.0
    %137 = vmatpush1.xpose.msra.mxu0 0.0
    %138 = vmatprep.subr.mxu0 0.0
    %139 = vmatpush1.xpose.msra.mxu0 0.0
    %140 = vmatprep.subr.mxu0 0.0
    %141 = vmatpush1.xpose.msra.mxu0 0.0
    %142 = vmatprep.subr.mxu0 0.0
    %143 = vmatpush1.xpose.msra.mxu0 0.0
    %144 = vmatprep.subr.mxu0 0.0
    %145 = vmatpush1.xpose.msra.mxu0 %v114
    %146 = vmatprep.subr.mxu0 0.0
    %147 = vmatpush1.xpose.msra.mxu0 %v111
    %148 = vmatprep.subr.mxu0 0.0
    %149 = vmatpush2.xpose.msra.mxu0 0.0
    %150 = vmatprep.subr.mxu0 0.0
    %151 = vmatpush2.xpose.msra.mxu0 0.0
    %152 = vmatprep.subr.mxu0 0.0
    %153 = vmatpush2.xpose.msra.mxu0 0.0
    %154 = vmatprep.subr.mxu0 0.0
    %155 = vmatpush2.xpose.msra.mxu0 0.0
    %156 = vmatprep.subr.mxu0 0.0
    %157 = vmatpush2.xpose.msra.mxu0 0.0
    %158 = vmatprep.subr.mxu0 0.0
    %159 = vmatpush2.xpose.msra.mxu0 0.0
    %160 = vmatprep.subr.mxu0 0.0
    %161 = vmatpush2.xpose.msra.mxu0 0.0
    %162 = vmatprep.subr.mxu0 0.0
    %163 = vmatpush2.xpose.msra.mxu0 0.0
    %164 = vmatprep.subr.mxu0 0.0
    %165 = vmatpush2.xpose.msra.mxu0 0.0
    %166 = vmatprep.subr.mxu0 0.0
    %167 = vmatpush2.xpose.msra.mxu0 0.0
    %168 = vmatprep.subr.mxu0 0.0
    %169 = vmatpush2.xpose.msra.mxu0 0.0
    %170 = vmatprep.subr.mxu0 0.0
    %171 = vmatpush2.xpose.msra.mxu0 0.0
    %172 = vmatprep.subr.mxu0 0.0
    %173 = vmatpush2.xpose.msra.mxu0 0.0
    %174 = vmatprep.subr.mxu0 0.0
    %175 = vmatpush2.xpose.msra.mxu0 0.0
    %176 = vmatprep.subr.mxu0 0.0
    %177 = vmatpush2.xpose.msra.mxu0 0.0
    %178 = vmatprep.subr.mxu0 0.0
    %179 = vmatpush2.xpose.msra.mxu0 0.0
    %180 = vmatprep.mubr.f32.mxu0 0.0
    %181 = vmatmul.mubr.f32.gmra.mxu0 %v87
    %v182 = vpop.f32.mrf.mxu0
    %v183 = vadd.f32 %v48, %v182
    %v184 = vpop.f32.mrf.mxu0
    %185 = vmatprep.mubr.f32.mxu0 0.0
    %186 = vmatmul.mubr.f32.gmra.mxu0 %v90
    %v187 = vpop.f32.mrf.mxu0
    %v188 = vadd.f32 %v53, %v187
    %v189 = vpop.f32.mrf.mxu0
    %190 = vmatprep.mubr.f32.mxu0 0.0
    %191 = vmatmul.mubr.f32.gmra.mxu0 %v93
    %v192 = vpop.f32.mrf.mxu0
    %v193 = vadd.f32 %v58, %v192
    %v194 = vpop.f32.mrf.mxu0
    %195 = vmatprep.mubr.f32.mxu0 0.0
    %196 = vmatmul.mubr.f32.gmra.mxu0 %v96
    %v197 = vpop.f32.mrf.mxu0
    %v198 = vadd.f32 %v63, %v197
    %v199 = vpop.f32.mrf.mxu0
    %200 = vmatprep.mubr.f32.mxu0 0.0
    %201 = vmatmul.mubr.f32.gmra.mxu0 %v99
    %v202 = vpop.f32.mrf.mxu0
    %v203 = vadd.f32 %v68, %v202
    %v204 = vpop.f32.mrf.mxu0
    %205 = vmatprep.mubr.f32.mxu0 0.0
    %206 = vmatmul.mubr.f32.gmra.mxu0 %v102
    %v207 = vpop.f32.mrf.mxu0
    %v208 = vadd.f32 %v73, %v207
    %v209 = vpop.f32.mrf.mxu0
    %210 = vmatprep.mubr.f32.mxu0 0.0
    %211 = vmatmul.mubr.f32.gmra.mxu0 %v105
    %v212 = vpop.f32.mrf.mxu0
    %v213 = vadd.f32 %v78, %v212
    %v214 = vpop.f32.mrf.mxu0
    %215 = vmatprep.mubr.f32.mxu0 0.0
    %216 = vmatmul.mubr.f32.gmra.mxu0 %v108
    %v217 = vpop.f32.mrf.mxu0
    %v218 = vadd.f32 %v83, %v217
    %v219 = vpop.f32.mrf.mxu0
    %220 = vdwg.mxu0
    %v221 = vmax.f32 %v183, 0.0
    %v222 = vmax.f32 %v188, 0.0
    %v223 = vmax.f32 %v193, 0.0
    %v224 = vmax.f32 %v198, 0.0
    %v225 = vmax.f32 %v203, 0.0
    %v226 = vmax.f32 %v208, 0.0
    %v227 = vmax.f32 %v213, 0.0
    %v228 = vmax.f32 %v218, 0.0
    %v229 = vld [vmem:[%s3] sm:$0xff]
    %v230 = vld [vmem:[%s3 + $0x8] sm:$0xff]
    %v231 = vld [vmem:[%s3 + $0x10] sm:$0xff]
    %v232 = vld [vmem:[%s3 + $0x18] sm:$0xff]
    %v233 = vld [vmem:[%s4] sm:$0xff]
    %v234 = vld [vmem:[%s4 + $0x8] sm:$0xff]
    %v235 = vld [vmem:[%s4 + $0x10] sm:$0xff]
    %v236 = vld [vmem:[%s4 + $0x18] sm:$0xff]
    %238 = vset.pattern.permute.xlu0 0
    %239 = vperm.xlu0 %238, %v233
    %v240 = vpop.permute.xlu0 %239
    %243 = vset.pattern.permute.xlu0 0
    %244 = vperm.xlu0 %243, %v234
    %v245 = vpop.permute.xlu0 %244
    %248 = vset.pattern.permute.xlu0 0
    %249 = vperm.xlu0 %248, %v235
    %v250 = vpop.permute.xlu0 %249
    %253 = vset.pattern.permute.xlu0 0
    %254 = vperm.xlu0 %253, %v236
    %v255 = vpop.permute.xlu0 %254
    %vm257 = vcmask 261120
    %v259 = vsel %vm257, %v229, 0
    %v262 = vsel %vm257, %v230, 0
    %v265 = vsel %vm257, %v231, 0
    %v268 = vsel %vm257, %v232, 0
    %270 = vmatprep.subr.mxu0 0.0
    %271 = vmatpush1.msra.mxu0 0.0
    %272 = vmatprep.subr.mxu0 0.0
    %273 = vmatpush1.msra.mxu0 0.0
    %274 = vmatprep.subr.mxu0 0.0
    %275 = vmatpush1.msra.mxu0 0.0
    %276 = vmatprep.subr.mxu0 0.0
    %277 = vmatpush1.msra.mxu0 0.0
    %278 = vmatprep.subr.mxu0 0.0
    %279 = vmatpush1.msra.mxu0 0.0
    %280 = vmatprep.subr.mxu0 0.0
    %281 = vmatpush1.msra.mxu0 0.0
    %282 = vmatprep.subr.mxu0 0.0
    %283 = vmatpush1.msra.mxu0 0.0
    %284 = vmatprep.subr.mxu0 0.0
    %285 = vmatpush1.msra.mxu0 0.0
    %286 = vmatprep.subr.mxu0 0.0
    %287 = vmatpush1.msra.mxu0 0.0
    %288 = vmatprep.subr.mxu0 0.0
    %289 = vmatpush1.msra.mxu0 0.0
    %290 = vmatprep.subr.mxu0 0.0
    %291 = vmatpush1.msra.mxu0 0.0
    %292 = vmatprep.subr.mxu0 0.0
    %293 = vmatpush1.msra.mxu0 0.0
    %294 = vmatprep.subr.mxu0 0.0
    %295 = vmatpush1.msra.mxu0 %v224
    %296 = vmatprep.subr.mxu0 0.0
    %297 = vmatpush1.msra.mxu0 %v223
    %298 = vmatprep.subr.mxu0 0.0
    %299 = vmatpush1.msra.mxu0 %v222
    %300 = vmatprep.subr.mxu0 0.0
    %301 = vmatpush1.msra.mxu0 %v221
    %302 = vmatprep.subr.mxu0 0.0
    %303 = vmatpush2.msra.mxu0 0.0
    %304 = vmatprep.subr.mxu0 0.0
    %305 = vmatpush2.msra.mxu0 0.0
    %306 = vmatprep.subr.mxu0 0.0
    %307 = vmatpush2.msra.mxu0 0.0
    %308 = vmatprep.subr.mxu0 0.0
    %309 = vmatpush2.msra.mxu0 0.0
    %310 = vmatprep.subr.mxu0 0.0
    %311 = vmatpush2.msra.mxu0 0.0
    %312 = vmatprep.subr.mxu0 0.0
    %313 = vmatpush2.msra.mxu0 0.0
    %314 = vmatprep.subr.mxu0 0.0
    %315 = vmatpush2.msra.mxu0 0.0
    %316 = vmatprep.subr.mxu0 0.0
    %317 = vmatpush2.msra.mxu0 0.0
    %318 = vmatprep.subr.mxu0 0.0
    %319 = vmatpush2.msra.mxu0 0.0
    %320 = vmatprep.subr.mxu0 0.0
    %321 = vmatpush2.msra.mxu0 0.0
    %322 = vmatprep.subr.mxu0 0.0
    %323 = vmatpush2.msra.mxu0 0.0
    %324 = vmatprep.subr.mxu0 0.0
    %325 = vmatpush2.msra.mxu0 0.0
    %326 = vmatprep.subr.mxu0 0.0
    %327 = vmatpush2.msra.mxu0 0.0
    %328 = vmatprep.subr.mxu0 0.0
    %329 = vmatpush2.msra.mxu0 0.0
    %330 = vmatprep.subr.mxu0 0.0
    %331 = vmatpush2.msra.mxu0 0.0
    %332 = vmatprep.subr.mxu0 0.0
    %333 = vmatpush2.msra.mxu0 0.0
    %334 = vmatprep.mubr.f32.mxu0 0.0
    %335 = vmatmul.mubr.f32.gmra.mxu0 %v259
    %v336 = vpop.f32.mrf.mxu0
    %v337 = vadd.f32 %v240, %v336
    %v338 = vpop.f32.mrf.mxu0
    %339 = vmatprep.mubr.f32.mxu0 0.0
    %340 = vmatmul.mubr.f32.gmra.mxu0 %v262
    %v341 = vpop.f32.mrf.mxu0
    %v342 = vadd.f32 %v245, %v341
    %v343 = vpop.f32.mrf.mxu0
    %344 = vmatprep.mubr.f32.mxu0 0.0
    %345 = vmatmul.mubr.f32.gmra.mxu0 %v265
    %v346 = vpop.f32.mrf.mxu0
    %v347 = vadd.f32 %v250, %v346
    %v348 = vpop.f32.mrf.mxu0
    %349 = vmatprep.mubr.f32.mxu0 0.0
    %350 = vmatmul.mubr.f32.gmra.mxu0 %v268
    %v351 = vpop.f32.mrf.mxu0
    %v352 = vadd.f32 %v255, %v351
    %v353 = vpop.f32.mrf.mxu0
    %354 = vdwg.mxu0
    %v355 = vmax.f32 %v337, 0.0
    %v356 = vmax.f32 %v342, 0.0
    %v357 = vmax.f32 %v347, 0.0
    %v358 = vmax.f32 %v352, 0.0
    %v359 = vld [vmem:[%s5] sm:$0x7]
    %v360 = vld [vmem:[%s6] sm:$0x7]
    %362 = vset.pattern.permute.xlu0 0
    %363 = vperm.xlu0 %362, %v360
    %v364 = vpop.permute.xlu0 %363
    %vm366 = vcmask 523264
    %v368 = vsel %vm366, %v359, 0
    %370 = vmatprep.subr.mxu0 0.0
    %371 = vmatpush1.msra.mxu0 0.0
    %372 = vmatprep.subr.mxu0 0.0
    %373 = vmatpush1.msra.mxu0 0.0
    %374 = vmatprep.subr.mxu0 0.0
    %375 = vmatpush1.msra.mxu0 0.0
    %376 = vmatprep.subr.mxu0 0.0
    %377 = vmatpush1.msra.mxu0 0.0
    %378 = vmatprep.subr.mxu0 0.0
    %379 = vmatpush1.msra.mxu0 0.0
    %380 = vmatprep.subr.mxu0 0.0
    %381 = vmatpush1.msra.mxu0 0.0
    %382 = vmatprep.subr.mxu0 0.0
    %383 = vmatpush1.msra.mxu0 0.0
    %384 = vmatprep.subr.mxu0 0.0
    %385 = vmatpush1.msra.mxu0 0.0
    %386 = vmatprep.subr.mxu0 0.0
    %387 = vmatpush1.msra.mxu0 %v228
    %388 = vmatprep.subr.mxu0 0.0
    %389 = vmatpush1.msra.mxu0 %v227
    %390 = vmatprep.subr.mxu0 0.0
    %391 = vmatpush1.msra.mxu0 %v226
    %392 = vmatprep.subr.mxu0 0.0
    %393 = vmatpush1.msra.mxu0 %v225
    %394 = vmatprep.subr.mxu0 0.0
    %395 = vmatpush1.msra.mxu0 %v358
    %396 = vmatprep.subr.mxu0 0.0
    %397 = vmatpush1.msra.mxu0 %v357
    %398 = vmatprep.subr.mxu0 0.0
    %399 = vmatpush1.msra.mxu0 %v356
    %400 = vmatprep.subr.mxu0 0.0
    %401 = vmatpush1.msra.mxu0 %v355
    %402 = vmatprep.subr.mxu0 0.0
    %403 = vmatpush2.msra.mxu0 0.0
    %404 = vmatprep.subr.mxu0 0.0
    %405 = vmatpush2.msra.mxu0 0.0
    %406 = vmatprep.subr.mxu0 0.0
    %407 = vmatpush2.msra.mxu0 0.0
    %408 = vmatprep.subr.mxu0 0.0
    %409 = vmatpush2.msra.mxu0 0.0
    %410 = vmatprep.subr.mxu0 0.0
    %411 = vmatpush2.msra.mxu0 0.0
    %412 = vmatprep.subr.mxu0 0.0
    %413 = vmatpush2.msra.mxu0 0.0
    %414 = vmatprep.subr.mxu0 0.0
    %415 = vmatpush2.msra.mxu0 0.0
    %416 = vmatprep.subr.mxu0 0.0
    %417 = vmatpush2.msra.mxu0 0.0
    %418 = vmatprep.subr.mxu0 0.0
    %419 = vmatpush2.msra.mxu0 0.0
    %420 = vmatprep.subr.mxu0 0.0
    %421 = vmatpush2.msra.mxu0 0.0
    %422 = vmatprep.subr.mxu0 0.0
    %423 = vmatpush2.msra.mxu0 0.0
    %424 = vmatprep.subr.mxu0 0.0
    %425 = vmatpush2.msra.mxu0 0.0
    %426 = vmatprep.subr.mxu0 0.0
    %427 = vmatpush2.msra.mxu0 0.0
    %428 = vmatprep.subr.mxu0 0.0
    %429 = vmatpush2.msra.mxu0 0.0
    %430 = vmatprep.subr.mxu0 0.0
    %431 = vmatpush2.msra.mxu0 0.0
    %432 = vmatprep.subr.mxu0 0.0
    %433 = vmatpush2.msra.mxu0 0.0
    %434 = vmatprep.mubr.f32.mxu0 0.0
    %435 = vmatmul.mubr.f32.gmra.mxu0 %v368
    %v436 = vpop.f32.mrf.mxu0
    %v437 = vadd.f32 %v364, %v436
    %v438 = vpop.f32.mrf.mxu0
    %439 = vdwg.mxu0
    %v440 = vmul.f32 %v437, %v437
    %vm441 = vcmask 123904
    %v442 = vsel %vm441, %v440, 0.0
    %v443 = vrot.slane %v442, 4
    %v444 = vadd.f32 %v442, %v443
    %v445 = vrot.slane %v444, 2
    %v446 = vadd.f32 %v444, %v445
    %v447 = vrot.slane %v446, 1
    %v448 = vadd.f32 %v446, %v447
    %v449 = vadd.f32 %v448, 1e-30
    %v450 = vrsqrt.pop %v449
    %v451 = vmul.f32 %v437, %v450
    %452 = vst.msk [vmem:[#allocation2] sm:$0x3] %vm441, %v451
    %v453 = vmax.f32 %v437, 0.0
    %v454 = vand.u32 2147483647, %v437
    %v455 = vsub.f32 0.0, %v454
    %v456 = vmul.f32 %v455, 1.442695
    %v457 = vpow.pop %v456
    %v458 = vadd.f32 %v457, 1.0
    %v459 = vlog2.pop %v458
    %v460 = vmul.f32 %v459, 0.6931472
    %v461 = vmul.f32 -0.5, %v457
    %v462 = vadd.f32 %v461, 1.0
    %v463 = vmul.f32 %v462, %v457
    %v464 = vand.u32 2147483647, %v457
    %vm465 = vcmp.lt.f32.partialorder %v464, 0.0004427343
    %v466 = vsel %vm465, %v463, %v460
    %v467 = vadd.f32 %v453, %v466
    %v468 = vmul.f32 %v467, 11.407551
    %v469 = vadd.f32 %v468, -4.9328938
    %v470 = vmul.f32 %v469, 1.442695
    %v471 = vpow.pop %v470
    %vm472 = vcmask 124930
    %473 = vst.msk [vmem:[#allocation2] sm:$0x4] %vm472, %v471
    // Predicated region
    $region30: #{tpu_custom_call.1} parent=1 // pred_check
      _
    $region31: #{tpu_custom_call.1} parent=1 // pred_check_branch
      %475 = sbr.rel (0) target = $region33
    $region32: #{tpu_custom_call.1} parent=1 // pred_region
      %s477 = ssub.s32 64, 64
      %478 = vsyncadd [#allocation3], %s477
      %s480 = sshll.u32 [#allocation2], 4
      %s481 = int_to_ptr.vmem [resolvable:$true] %s480
      %483 = dma.vmem_to_hbm [thread:$0]  %s481, 64, %s7, [#allocation3]
    $region33: #{tpu_custom_call.1} parent=1 // pred_fallthru
      _
    // Predicated region
    $region34: #{tpu_custom_call.1} parent=1 // pred_check
      _
    $region35: #{tpu_custom_call.1} parent=1 // pred_check_branch
      %485 = sbr.rel (0) target = $region37
    $region36: #{tpu_custom_call.1} parent=1 // pred_region
      %486 = dma.done [#allocation3], 64
    $region37: #{tpu_custom_call.1} parent=1 // pred_fallthru
      _
    %487 = vsyncpa [#allocation3], 1

</llo_original>
